<compile_context>
chip_gen: v6e
topology: v6e:2x2x1
jax: 0.10.0
libtpu: 0.0.40
codegen_flags: <defaults>
</compile_context>

<pallas_src>
import functools

import jax
import jax.numpy as jnp
from jax.experimental import pallas as pl
from jax.experimental.pallas import tpu as pltpu


def _shortcut_kernel(p_ref, s_ref, x_ref, o_ref, *, bt):
    # p_ref: (c_out, C)     0/1 channel-pad matrix       (constant block)
    # s_ref: (H*W, T)       0/1 spatial decimation matrix (constant block)
    # x_ref: (bt, C, H*W)   bt input images, spatial flattened on lanes
    # o_ref: (bt, c_out, T) bt output images, T = h_out*w_out on lanes
    p = p_ref[...].astype(jnp.float32)
    s = s_ref[...].astype(jnp.float32)
    for j in range(bt):                                   # small static unroll
        v = x_ref[j].astype(jnp.float32)                  # (C, H*W) full-tile load
        sub = jnp.dot(v, s, preferred_element_type=jnp.float32)    # (C, T)
        out = jnp.dot(p, sub, preferred_element_type=jnp.float32)  # (c_out, T)
        o_ref[j] = out.astype(o_ref.dtype)                # one unmasked full store


def _pick_batch_tile(B, per_image_block_bytes, *, vmem_budget=4 << 20):
    """Largest divisor of B whose block fits the budget, keeping >= 2 grid
    steps when B >= 2 (so both v7x TensorCores get work)."""
    best = 1
    for d in range(1, B + 1):
        if B % d:
            continue
        if B >= 2 and B // d < 2:
            continue
        if d * per_image_block_bytes > vmem_budget:
            continue
        best = d
    return best


def lambda_layer(x_nchw, planes):
    """Option-A ResNet shortcut: x[:, :, ::2, ::2] zero-padded on channels."""
    B, C, H, W = x_nchw.shape
    pad = planes // 4
    c_out = C + 2 * pad
    h_out, w_out = (H + 1) // 2, (W + 1) // 2     # ceil -> matches ::2 exactly
    hw, t = H * W, h_out * w_out
    dtype = x_nchw.dtype
    itemsize = jnp.dtype(dtype).itemsize

    # Free contiguous reshape (no transpose): spatial goes on the lane axis.
    x_flat = x_nchw.reshape(B, C, hw)

    # 0/1 selection matrices, built once (tiny, cached under jit).
    tt = jnp.arange(t, dtype=jnp.int32)
    src = 2 * (tt // w_out) * W + 2 * (tt % w_out)                       # (t,)
    sel = (jnp.arange(hw, dtype=jnp.int32)[:, None] == src[None, :]
           ).astype(jnp.float32)                                         # (hw, t)
    pmat = (jnp.arange(c_out, dtype=jnp.int32)[:, None]
            == (jnp.arange(C, dtype=jnp.int32)[None, :] + pad)
            ).astype(jnp.float32)                                        # (c_out, C)

    # Batch tile: coarse enough to amortize per-step overhead, small enough to
    # stay far inside v7x's 64 MiB VMEM (input+output, double buffered).
    per_img = 2 * (C * hw + c_out * t) * itemsize
    bt = _pick_batch_tile(B, per_img)
    grid = (B // bt,)

    cost = pl.CostEstimate(
        flops=2 * B * (C * hw * t + c_out * C * t),
        transcendentals=0,
        bytes_accessed=(x_flat.size + B * c_out * t) * itemsize
        + (sel.size + pmat.size) * 4,
    )

    out_flat = pl.pallas_call(
        functools.partial(_shortcut_kernel, bt=bt),
        out_shape=jax.ShapeDtypeStruct((B, c_out, t), dtype),
        grid=grid,
        in_specs=[
            pl.BlockSpec((c_out, C), lambda i: (0, 0)),      # pmat (fetched once)
            pl.BlockSpec((hw, t), lambda i: (0, 0)),         # sel  (fetched once)
            pl.BlockSpec((bt, C, hw), lambda i: (i, 0, 0)),  # bt whole images/step
        ],
        out_specs=pl.BlockSpec((bt, c_out, t), lambda i: (i, 0, 0)),
        compiler_params=pltpu.CompilerParams(
            dimension_semantics=("parallel",)),
        cost_estimate=cost,
    )(pmat, sel, x_flat)

    # Free contiguous reshape back to NCHW output convention.
    return out_flat.reshape(B, c_out, h_out, w_out)


if __name__ == "__main__":
    key = jax.random.PRNGKey(0)
    B, C, H, W = 2, 4, 16, 16          # small NCHW input
    planes = 2 * C                      # typical option-A use: planes = 2*in_planes
    x = jax.random.normal(key, (B, C, H, W), dtype=jnp.float32)

    out = jax.block_until_ready(lambda_layer(x, planes))

    # pure-JAX reference of the lambda
    pad = planes // 4
    ref = jnp.pad(x[:, :, ::2, ::2], ((0, 0), (pad, pad), (0, 0), (0, 0)))

    assert out.shape == ref.shape, (out.shape, ref.shape)
    assert out.dtype == x.dtype
    assert jnp.allclose(out, ref), "mismatch vs reference"

    print("KERNEL_OK")
</pallas_src>

<mosaic_0001>
module attributes {stable_mosaic.version = 11 : i64} {
  func.func @_shortcut_kernel(%arg0: i32, %arg1: memref<8x4xf32, #tpu.memory_space<vmem>>, %arg2: memref<256x64xf32, #tpu.memory_space<vmem>>, %arg3: memref<1x4x256xf32, #tpu.memory_space<vmem>>, %arg4: memref<1x8x64xf32, #tpu.memory_space<vmem>>) attributes {dimension_semantics = [#tpu.dimension_semantics<parallel>], iteration_bounds = array<i64: 2>, scalar_prefetch = 0 : i64, scratch_operands = 0 : i64, tpu.core_type = #tpu.core_type<tc>, window_params = [{pipeline_mode = #tpu.pipeline_mode<synchronous>, transform_indices = @transform_0, window_bounds = array<i64: 8, 4>}, {pipeline_mode = #tpu.pipeline_mode<synchronous>, transform_indices = @transform_1, window_bounds = array<i64: 256, 64>}, {transform_indices = @transform_2, window_bounds = array<i64: 1, 4, 256>}, {transform_indices = @transform_3, window_bounds = array<i64: 1, 8, 64>}]} {
    %c0 = arith.constant 0 : index
    %c0_0 = arith.constant 0 : index
    %0 = vector.load %arg1[%c0, %c0_0] : memref<8x4xf32, #tpu.memory_space<vmem>>, vector<8x4xf32>
    %c0_1 = arith.constant 0 : index
    %c0_2 = arith.constant 0 : index
    %1 = vector.load %arg2[%c0_1, %c0_2] : memref<256x64xf32, #tpu.memory_space<vmem>>, vector<256x64xf32>
    %c0_3 = arith.constant 0 : index
    %c0_4 = arith.constant 0 : index
    %c0_5 = arith.constant 0 : index
    %2 = vector.load %arg3[%c0_3, %c0_4, %c0_5] : memref<1x4x256xf32, #tpu.memory_space<vmem>>, vector<1x4x256xf32>
    %3 = vector.shape_cast %2 : vector<1x4x256xf32> to vector<4x256xf32>
    %cst = arith.constant dense<0.000000e+00> : vector<4x64xf32>
    %4 = tpu.matmul %3, %1, %cst {dimension_numbers = #tpu.dot_dimension_numbers<[1], [0], [0], [1], [0, 0, 1, 1], [], []>} : vector<4x256xf32>, vector<256x64xf32>, vector<4x64xf32> -> vector<4x64xf32>
    %cst_6 = arith.constant dense<0.000000e+00> : vector<8x64xf32>
    %5 = tpu.matmul %0, %4, %cst_6 {dimension_numbers = #tpu.dot_dimension_numbers<[1], [0], [0], [1], [0, 0, 1, 1], [], []>} : vector<8x4xf32>, vector<4x64xf32>, vector<8x64xf32> -> vector<8x64xf32>
    %c0_7 = arith.constant 0 : index
    %c0_8 = arith.constant 0 : index
    %c0_9 = arith.constant 0 : index
    %6 = vector.load %arg4[%c0_7, %c0_8, %c0_9] : memref<1x8x64xf32, #tpu.memory_space<vmem>>, vector<1x8x64xf32>
    %7 = vector.shape_cast %6 : vector<1x8x64xf32> to vector<8x64xf32>
    %8 = vector.shape_cast %5 : vector<8x64xf32> to vector<1x8x64xf32>
    tpu.vector_store %arg4[%c0_7, %c0_8, %c0_9], %8 {strides = array<i32>} : memref<1x8x64xf32, #tpu.memory_space<vmem>>, vector<1x8x64xf32>,
    return
  }
  func.func @transform_0(%arg0: i32) -> (i32, i32) {
    %c0_i32 = arith.constant 0 : i32
    %c0_i32_0 = arith.constant 0 : i32
    %c0_i32_1 = arith.constant 0 : i32
    return %c0_i32, %c0_i32_0 : i32, i32
  }
  func.func @transform_1(%arg0: i32) -> (i32, i32) {
    %c0_i32 = arith.constant 0 : i32
    %c0_i32_0 = arith.constant 0 : i32
    %c0_i32_1 = arith.constant 0 : i32
    return %c0_i32, %c0_i32_0 : i32, i32
  }
  func.func @transform_2(%arg0: i32) -> (i32, i32, i32) {
    %c0_i32 = arith.constant 0 : i32
    %c0_i32_0 = arith.constant 0 : i32
    %c0_i32_1 = arith.constant 0 : i32
    return %arg0, %c0_i32, %c0_i32_0 : i32, i32, i32
  }
  func.func @transform_3(%arg0: i32) -> (i32, i32, i32) {
    %c0_i32 = arith.constant 0 : i32
    %c0_i32_0 = arith.constant 0 : i32
    %c0_i32_1 = arith.constant 0 : i32
    return %arg0, %c0_i32, %c0_i32_0 : i32, i32, i32
  }
}

</mosaic_0001>

<llo_original>
// kernel: tpu_custom_call.1
$region0: #{tpu_custom_call.1}
  #allocation0 [shape = 'u32[]', space=smem, size = 0x4, offset = 0x4, fixed_abs, tag = 'smem constant byte address 0x4 - core index']
  #allocation1 [shape = 'u32[144,128]{1,0:T(1,128)}', space=vmem, size = 0x12000, scoped, tag = 'internal scratch']
  %s0 = inlined_call_operand.vmem [shape: f32[8,4], index: 0, kind: input, shape index: {}]
  %s1 = inlined_call_operand.vmem [shape: f32[256,64], index: 1, kind: input, shape index: {}]
  %s2 = inlined_call_operand.vmem [shape: f32[2,4,256], index: 2, kind: input, shape index: {}]
  %s3 = inlined_call_operand.hbm [shape: f32[2,8,64], index: 3, kind: output, shape index: {}]
  %s4 = sld [smem:[#allocation0]]
  $region45: #{tpu_custom_call.1} parent=0
    _
  %s6 = ssub.s32 1, %s4
  %s7 = scalar_select 0, %s6, %s4
  $region1: #{tpu_custom_call.1} parent=0
    #allocation2 [shape = 'u8[8192]{0}', space=vmem, size = 0x2000, scoped, tag = 'output window, operand 0']
    #allocation3 [shape = 's32[2]{0}', space=sflag, size = 0x8, scoped, tag = 'scoped memory for tpu_custom_call.1']
    %8 = vsyncpa [#allocation3], 0
    %s9 = scalar_lea.sflag [#allocation3], 1
    %10 = vsyncpa %s9, 0
    loop: start=0, step=1, limit=4
    $region2: #{tpu_custom_call.1} parent=1 // loop_pre_header
      _
    $region3: #{tpu_custom_call.1} parent=1 // loop_header
      %s12 = sphi 0, %s16
      %p13 = scmp.ge.s32.totalorder %s12, 4
      %s20 = sphi 0, %s20
      %s22 = sphi 0, %s20
      %s23 = sphi 0, %s22
      %s37 = sphi 0, %s23
      %s41 = sphi 0, %s41
      %s43 = sphi 0, %s41
      %s44 = sphi 0, %s43
      %s58 = sphi 0, %s44
      %s64 = sphi 0, %s66
      %s67 = sphi 0, %s64
      %s68 = sphi 0, %s67
      %s84 = sphi 0, %s68
      %s90 = sphi 0, %s92
      %s93 = sphi 0, %s90
      %s94 = sphi 0, %s93
      %s110 = sphi 0, %s94
    $region4: #{tpu_custom_call.1} parent=1 // loop_header_branch
      %15 = sbr.rel (%p13) target = $region8
    $region5: #{tpu_custom_call.1} parent=1 // loop_body
      %s17 = ssub.s32 %s12, 1
      %s18 = ssub.s32 %s12, 2
      %s19 = sadd.s32 %s12, 1
      %s21 = sadd.s32 %s20, 1
      %p24 = scmp.eq.s32.totalorder %s12, 1
      %p25 = scmp.ne.s32.totalorder %s20, %s22
      %p26 = scmp.eq.s32.totalorder %s12, 0
      %p27 = por %p25, %p26
      %p28 = scmp.ne.s32.totalorder %s20, %s22
      %p29 = scmp.eq.s32.totalorder %s17, 1
      %p30 = por %p28, %p29
      %p31 = scmp.ne.s32.totalorder %s22, %s23
      %p32 = scmp.eq.s32.totalorder %s17, 0
      %p33 = por %p31, %p32
      %p34 = scmp.ne.s32.totalorder %s22, %s23
      %p35 = scmp.eq.s32.totalorder %s18, 1
      %p36 = por %p34, %p35
      %p38 = scmp.ne.s32.totalorder %s23, %s37
      %p39 = scmp.eq.s32.totalorder %s18, 0
      %p40 = por %p38, %p39
      %s42 = sadd.s32 %s41, 1
      %p45 = scmp.eq.s32.totalorder %s12, 1
      %p46 = scmp.ne.s32.totalorder %s41, %s43
      %p47 = scmp.eq.s32.totalorder %s12, 0
      %p48 = por %p46, %p47
      %p49 = scmp.ne.s32.totalorder %s41, %s43
      %p50 = scmp.eq.s32.totalorder %s17, 1
      %p51 = por %p49, %p50
      %p52 = scmp.ne.s32.totalorder %s43, %s44
      %p53 = scmp.eq.s32.totalorder %s17, 0
      %p54 = por %p52, %p53
      %p55 = scmp.ne.s32.totalorder %s43, %s44
      %p56 = scmp.eq.s32.totalorder %s18, 1
      %p57 = por %p55, %p56
      %p59 = scmp.ne.s32.totalorder %s44, %s58
      %p60 = scmp.eq.s32.totalorder %s18, 0
      %p61 = por %p59, %p60
      %s62 = ssub.s32 %s12, %s19
      %p63 = scmp.eq.s32.totalorder %s62, 0
      %s65 = sadd.s32 %s64, 1
      %s66 = scalar_select %p63, %s64, %s65
      %p69 = pneg %p63
      %p70 = scmp.eq.s32.totalorder %s12, 1
      %p71 = por %p69, %p70
      %p72 = scmp.ne.s32.totalorder %s64, %s67
      %p73 = scmp.eq.s32.totalorder %s12, 0
      %p74 = por %p72, %p73
      %p75 = scmp.ne.s32.totalorder %s64, %s67
      %p76 = scmp.eq.s32.totalorder %s17, 1
      %p77 = por %p75, %p76
      %p78 = scmp.ne.s32.totalorder %s67, %s68
      %p79 = scmp.eq.s32.totalorder %s17, 0
      %p80 = por %p78, %p79
      %p81 = scmp.ne.s32.totalorder %s67, %s68
      %p82 = scmp.eq.s32.totalorder %s18, 1
      %p83 = por %p81, %p82
      %p85 = scmp.ne.s32.totalorder %s68, %s84
      %p86 = scmp.eq.s32.totalorder %s18, 0
      %p87 = por %p85, %p86
      %s88 = ssub.s32 %s12, %s19
      %p89 = scmp.eq.s32.totalorder %s88, 0
      %s91 = sadd.s32 %s90, 1
      %s92 = scalar_select %p89, %s90, %s91
      %p95 = pneg %p89
      %p96 = scmp.eq.s32.totalorder %s12, 1
      %p97 = por %p95, %p96
      %p98 = scmp.ne.s32.totalorder %s90, %s93
      %p99 = scmp.eq.s32.totalorder %s12, 0
      %p100 = por %p98, %p99
      %p101 = scmp.ne.s32.totalorder %s90, %s93
      %p102 = scmp.eq.s32.totalorder %s17, 1
      %p103 = por %p101, %p102
      %p104 = scmp.ne.s32.totalorder %s93, %s94
      %p105 = scmp.eq.s32.totalorder %s17, 0
      %p106 = por %p104, %p105
      %p107 = scmp.ne.s32.totalorder %s93, %s94
      %p108 = scmp.eq.s32.totalorder %s18, 1
      %p109 = por %p107, %p108
      %p111 = scmp.ne.s32.totalorder %s94, %s110
      %p112 = scmp.eq.s32.totalorder %s18, 0
      %p113 = por %p111, %p112
      %p114 = scmp.le.s32.totalorder 1, %s12
      %p115 = scmp.lt.s32.totalorder %s12, 3
      %p116 = pnand %p114, %p115
      %p117 = pneg %p116
      // Predicated region
      $region9: #{tpu_custom_call.1} parent=5 // pred_check
        _
      $region10: #{tpu_custom_call.1} parent=5 // pred_check_branch
        %119 = sbr.rel (%p116) target = $region12
      $region11: #{tpu_custom_call.1} parent=5 // pred_region
        %s120 = ssub.s32 %s12, 1
        // Predicated region
        $region13: #{tpu_custom_call.1} parent=11 // pred_check
          %p121 = pneg %p33
        $region14: #{tpu_custom_call.1} parent=11 // pred_check_branch
          %123 = sbr.rel (%p121) target = $region16
        $region15: #{tpu_custom_call.1} parent=11 // pred_region
          _
        $region16: #{tpu_custom_call.1} parent=11 // pred_fallthru
          _
        // Predicated region
        $region17: #{tpu_custom_call.1} parent=11 // pred_check
          %p124 = pneg %p54
        $region18: #{tpu_custom_call.1} parent=11 // pred_check_branch
          %126 = sbr.rel (%p124) target = $region20
        $region19: #{tpu_custom_call.1} parent=11 // pred_region
          _
        $region20: #{tpu_custom_call.1} parent=11 // pred_fallthru
          _
      $region12: #{tpu_custom_call.1} parent=5 // pred_fallthru
        _
      %p127 = scmp.lt.s32.totalorder %s12, 2
      // Predicated region
      $region21: #{tpu_custom_call.1} parent=5 // pred_check
        %p128 = pneg %p127
      $region22: #{tpu_custom_call.1} parent=5 // pred_check_branch
        %130 = sbr.rel (%p128) target = $region24
      $region23: #{tpu_custom_call.1} parent=5 // pred_region
        // Predicated region
        $region25: #{tpu_custom_call.1} parent=23 // pred_check
          %p131 = pneg %p74
        $region26: #{tpu_custom_call.1} parent=23 // pred_check_branch
          %133 = sbr.rel (%p131) target = $region28
        $region27: #{tpu_custom_call.1} parent=23 // pred_region
          %p134 = scmp.lt.s32.totalorder %s12, 1
          %s135 = scalar_select %p134, %s12, 1
          %s136 = smul.addr %s135, 2
          %s137 = smul.addr %s136, 4
          %s138 = scalar_lea.vmem %s2, %s137
        $region28: #{tpu_custom_call.1} parent=23 // pred_fallthru
          _
      $region24: #{tpu_custom_call.1} parent=5 // pred_fallthru
        _
      %p139 = scmp.le.s32.totalorder 1, %s12
      %p140 = scmp.lt.s32.totalorder %s12, 3
      %p141 = pnand %p139, %p140
      %p142 = pneg %p141
      // Predicated region
      $region29: #{tpu_custom_call.1} parent=5 // pred_check
        _
      $region30: #{tpu_custom_call.1} parent=5 // pred_check_branch
        %144 = sbr.rel (%p141) target = $region32
      $region31: #{tpu_custom_call.1} parent=5 // pred_region
        %s145 = ssub.s32 %s12, 1
        %p146 = pneg %p33
        %p147 = pneg %p30
        %p148 = pneg %p54
        %p149 = pneg %p51
        %p150 = scmp.lt.s32.totalorder %s17, 1
        %s151 = scalar_select %p150, %s17, 1
        %s152 = smul.addr %s151, 2
        %s153 = smul.addr %s152, 4
        %s154 = scalar_lea.vmem %s2, %s153
        %p155 = pneg %p80
        %p156 = pneg %p77
        %p157 = pneg %p106
        %p158 = pneg %p103
        %s159 = sand.u32 %s93, 1
        %s160 = scalar_lea.sflag [#allocation3], %s159
        %s161 = sand.u32 %s93, 1
        %s162 = smul.addr %s161, 8
        %s163 = scalar_lea.vmem [#allocation2], %s162
        %p164 = scmp.lt.s32.totalorder %s17, 1
        %s165 = scalar_select %p164, %s17, 1
        %s166 = smul.addr %s165, 2
        %s167 = smul.addr %s166, 4
        %s168 = scalar_lea.vmem %s2, %s167
        %v169 = vld [vmem:[%s0] sm:$0xff]
        %v170 = vld [vmem:[%s1] sm:$0xff]
        %v171 = vld [vmem:[%s1 + $0x8] sm:$0xff]
        %v172 = vld [vmem:[%s1 + $0x10] sm:$0xff]
        %v173 = vld [vmem:[%s1 + $0x18] sm:$0xff]
        %v174 = vld [vmem:[%s1 + $0x20] sm:$0xff]
        %v175 = vld [vmem:[%s1 + $0x28] sm:$0xff]
        %v176 = vld [vmem:[%s1 + $0x30] sm:$0xff]
        %v177 = vld [vmem:[%s1 + $0x38] sm:$0xff]
        %v178 = vld [vmem:[%s1 + $0x40] sm:$0xff]
        %v179 = vld [vmem:[%s1 + $0x48] sm:$0xff]
        %v180 = vld [vmem:[%s1 + $0x50] sm:$0xff]
        %v181 = vld [vmem:[%s1 + $0x58] sm:$0xff]
        %v182 = vld [vmem:[%s1 + $0x60] sm:$0xff]
        %v183 = vld [vmem:[%s1 + $0x68] sm:$0xff]
        %v184 = vld [vmem:[%s1 + $0x70] sm:$0xff]
        %v185 = vld [vmem:[%s1 + $0x78] sm:$0xff]
        %v186 = vld [vmem:[%s1 + $0x80] sm:$0xff]
        %v187 = vld [vmem:[%s1 + $0x88] sm:$0xff]
        %v188 = vld [vmem:[%s1 + $0x90] sm:$0xff]
        %v189 = vld [vmem:[%s1 + $0x98] sm:$0xff]
        %v190 = vld [vmem:[%s1 + $0xa0] sm:$0xff]
        %v191 = vld [vmem:[%s1 + $0xa8] sm:$0xff]
        %v192 = vld [vmem:[%s1 + $0xb0] sm:$0xff]
        %v193 = vld [vmem:[%s1 + $0xb8] sm:$0xff]
        %v194 = vld [vmem:[%s1 + $0xc0] sm:$0xff]
        %v195 = vld [vmem:[%s1 + $0xc8] sm:$0xff]
        %v196 = vld [vmem:[%s1 + $0xd0] sm:$0xff]
        %v197 = vld [vmem:[%s1 + $0xd8] sm:$0xff]
        %v198 = vld [vmem:[%s1 + $0xe0] sm:$0xff]
        %v199 = vld [vmem:[%s1 + $0xe8] sm:$0xff]
        %v200 = vld [vmem:[%s1 + $0xf0] sm:$0xff]
        %v201 = vld [vmem:[%s1 + $0xf8] sm:$0xff]
        %v202 = vld [vmem:[%s168] sm:$0xff]
        %v204 = vcombine.high %v202, %v202
        %206 = vmatprep.subr.mxu0 0.0
        %207 = vmatpush1.msra.mxu0 %v185
        %208 = vmatprep.subr.mxu0 0.0
        %209 = vmatpush1.msra.mxu0 %v184
        %210 = vmatprep.subr.mxu0 0.0
        %211 = vmatpush1.msra.mxu0 %v183
        %212 = vmatprep.subr.mxu0 0.0
        %213 = vmatpush1.msra.mxu0 %v182
        %214 = vmatprep.subr.mxu0 0.0
        %215 = vmatpush1.msra.mxu0 %v181
        %216 = vmatprep.subr.mxu0 0.0
        %217 = vmatpush1.msra.mxu0 %v180
        %218 = vmatprep.subr.mxu0 0.0
        %219 = vmatpush1.msra.mxu0 %v179
        %220 = vmatprep.subr.mxu0 0.0
        %221 = vmatpush1.msra.mxu0 %v178
        %222 = vmatprep.subr.mxu0 0.0
        %223 = vmatpush1.msra.mxu0 %v177
        %224 = vmatprep.subr.mxu0 0.0
        %225 = vmatpush1.msra.mxu0 %v176
        %226 = vmatprep.subr.mxu0 0.0
        %227 = vmatpush1.msra.mxu0 %v175
        %228 = vmatprep.subr.mxu0 0.0
        %229 = vmatpush1.msra.mxu0 %v174
        %230 = vmatprep.subr.mxu0 0.0
        %231 = vmatpush1.msra.mxu0 %v173
        %232 = vmatprep.subr.mxu0 0.0
        %233 = vmatpush1.msra.mxu0 %v172
        %234 = vmatprep.subr.mxu0 0.0
        %235 = vmatpush1.msra.mxu0 %v171
        %236 = vmatprep.subr.mxu0 0.0
        %237 = vmatpush1.msra.mxu0 %v170
        %238 = vmatprep.subr.mxu0 0.0
        %239 = vmatpush2.msra.mxu0 %v201
        %240 = vmatprep.subr.mxu0 0.0
        %241 = vmatpush2.msra.mxu0 %v200
        %242 = vmatprep.subr.mxu0 0.0
        %243 = vmatpush2.msra.mxu0 %v199
        %244 = vmatprep.subr.mxu0 0.0
        %245 = vmatpush2.msra.mxu0 %v198
        %246 = vmatprep.subr.mxu0 0.0
        %247 = vmatpush2.msra.mxu0 %v197
        %248 = vmatprep.subr.mxu0 0.0
        %249 = vmatpush2.msra.mxu0 %v196
        %250 = vmatprep.subr.mxu0 0.0
        %251 = vmatpush2.msra.mxu0 %v195
        %252 = vmatprep.subr.mxu0 0.0
        %253 = vmatpush2.msra.mxu0 %v194
        %254 = vmatprep.subr.mxu0 0.0
        %255 = vmatpush2.msra.mxu0 %v193
        %256 = vmatprep.subr.mxu0 0.0
        %257 = vmatpush2.msra.mxu0 %v192
        %258 = vmatprep.subr.mxu0 0.0
        %259 = vmatpush2.msra.mxu0 %v191
        %260 = vmatprep.subr.mxu0 0.0
        %261 = vmatpush2.msra.mxu0 %v190
        %262 = vmatprep.subr.mxu0 0.0
        %263 = vmatpush2.msra.mxu0 %v189
        %264 = vmatprep.subr.mxu0 0.0
        %265 = vmatpush2.msra.mxu0 %v188
        %266 = vmatprep.subr.mxu0 0.0
        %267 = vmatpush2.msra.mxu0 %v187
        %268 = vmatprep.subr.mxu0 0.0
        %269 = vmatpush2.msra.mxu0 %v186
        %270 = vmatprep.mubr.f32.mxu0 %v204
        %271 = vmatmul.mubr.f32.gmra.mxu0 %v202
        %v272 = vpop.f32.mrf.mxu0
        %v273 = vadd.f32 0.0, %v272
        %v274 = vpop.f32.mrf.mxu0
        %275 = vdwg.mxu0
        %vm276 = vcmask 31744
        %v278 = vsel %vm276, %v169, 0
        %vm280 = vcmask 1043456
        %v282 = vsel %vm280, %v273, 0
        %284 = vmatprep.subr.mxu0 0.0
        %285 = vmatpush1.msra.mxu0 0.0
        %286 = vmatprep.subr.mxu0 0.0
        %287 = vmatpush1.msra.mxu0 0.0
        %288 = vmatprep.subr.mxu0 0.0
        %289 = vmatpush1.msra.mxu0 0.0
        %290 = vmatprep.subr.mxu0 0.0
        %291 = vmatpush1.msra.mxu0 0.0
        %292 = vmatprep.subr.mxu0 0.0
        %293 = vmatpush1.msra.mxu0 0.0
        %294 = vmatprep.subr.mxu0 0.0
        %295 = vmatpush1.msra.mxu0 0.0
        %296 = vmatprep.subr.mxu0 0.0
        %297 = vmatpush1.msra.mxu0 0.0
        %298 = vmatprep.subr.mxu0 0.0
        %299 = vmatpush1.msra.mxu0 0.0
        %300 = vmatprep.subr.mxu0 0.0
        %301 = vmatpush1.msra.mxu0 0.0
        %302 = vmatprep.subr.mxu0 0.0
        %303 = vmatpush1.msra.mxu0 0.0
        %304 = vmatprep.subr.mxu0 0.0
        %305 = vmatpush1.msra.mxu0 0.0
        %306 = vmatprep.subr.mxu0 0.0
        %307 = vmatpush1.msra.mxu0 0.0
        %308 = vmatprep.subr.mxu0 0.0
        %309 = vmatpush1.msra.mxu0 0.0
        %310 = vmatprep.subr.mxu0 0.0
        %311 = vmatpush1.msra.mxu0 0.0
        %312 = vmatprep.subr.mxu0 0.0
        %313 = vmatpush1.msra.mxu0 0.0
        %314 = vmatprep.subr.mxu0 0.0
        %315 = vmatpush1.msra.mxu0 %v282
        %316 = vmatprep.subr.mxu0 0.0
        %317 = vmatpush2.msra.mxu0 0.0
        %318 = vmatprep.subr.mxu0 0.0
        %319 = vmatpush2.msra.mxu0 0.0
        %320 = vmatprep.subr.mxu0 0.0
        %321 = vmatpush2.msra.mxu0 0.0
        %322 = vmatprep.subr.mxu0 0.0
        %323 = vmatpush2.msra.mxu0 0.0
        %324 = vmatprep.subr.mxu0 0.0
        %325 = vmatpush2.msra.mxu0 0.0
        %326 = vmatprep.subr.mxu0 0.0
        %327 = vmatpush2.msra.mxu0 0.0
        %328 = vmatprep.subr.mxu0 0.0
        %329 = vmatpush2.msra.mxu0 0.0
        %330 = vmatprep.subr.mxu0 0.0
        %331 = vmatpush2.msra.mxu0 0.0
        %332 = vmatprep.subr.mxu0 0.0
        %333 = vmatpush2.msra.mxu0 0.0
        %334 = vmatprep.subr.mxu0 0.0
        %335 = vmatpush2.msra.mxu0 0.0
        %336 = vmatprep.subr.mxu0 0.0
        %337 = vmatpush2.msra.mxu0 0.0
        %338 = vmatprep.subr.mxu0 0.0
        %339 = vmatpush2.msra.mxu0 0.0
        %340 = vmatprep.subr.mxu0 0.0
        %341 = vmatpush2.msra.mxu0 0.0
        %342 = vmatprep.subr.mxu0 0.0
        %343 = vmatpush2.msra.mxu0 0.0
        %344 = vmatprep.subr.mxu0 0.0
        %345 = vmatpush2.msra.mxu0 0.0
        %346 = vmatprep.subr.mxu0 0.0
        %347 = vmatpush2.msra.mxu0 0.0
        %348 = vmatprep.mubr.f32.mxu0 0.0
        %349 = vmatmul.mubr.f32.gmra.mxu0 %v278
        %v350 = vpop.f32.mrf.mxu0
        %v351 = vadd.f32 0.0, %v350
        %v352 = vpop.f32.mrf.mxu0
        %353 = vdwg.mxu0
        %vm354 = vcmask 523264
        %355 = vst.msk [vmem:[%s163] sm:$0xff] %vm354, %v351
        %s356 = sand.u32 %s93, 1
        %s357 = scalar_lea.sflag [#allocation3], %s356
        %s358 = sand.u32 %s93, 1
        %s359 = smul.addr %s358, 8
        %s360 = scalar_lea.vmem [#allocation2], %s359
        // Predicated region
        $region33: #{tpu_custom_call.1} parent=31 // pred_check
          %p361 = pneg %p103
        $region34: #{tpu_custom_call.1} parent=31 // pred_check_branch
          %363 = sbr.rel (%p361) target = $region36
        $region35: #{tpu_custom_call.1} parent=31 // pred_region
          %s365 = ssub.s32 128, 128
          %366 = vsyncadd %s357, %s365
          %s367 = smul.addr %s17, 128
          %s368 = scalar_lea.hbm %s3, %s367
          %s370 = sshll.u32 %s360, 4
          %s371 = int_to_ptr.vmem [resolvable:$true] %s370
          %373 = dma.vmem_to_hbm [thread:$0]  %s371, 128, %s368, %s357
        $region36: #{tpu_custom_call.1} parent=31 // pred_fallthru
          _
      $region32: #{tpu_custom_call.1} parent=5 // pred_fallthru
        _
      %p374 = scmp.le.s32.totalorder 2, %s12
      // Predicated region
      $region37: #{tpu_custom_call.1} parent=5 // pred_check
        %p375 = pneg %p374
      $region38: #{tpu_custom_call.1} parent=5 // pred_check_branch
        %377 = sbr.rel (%p375) target = $region40
      $region39: #{tpu_custom_call.1} parent=5 // pred_region
        %s378 = ssub.s32 %s12, 2
        // Predicated region
        $region41: #{tpu_custom_call.1} parent=39 // pred_check
          %p379 = pneg %p109
        $region42: #{tpu_custom_call.1} parent=39 // pred_check_branch
          %381 = sbr.rel (%p379) target = $region44
        $region43: #{tpu_custom_call.1} parent=39 // pred_region
          %s382 = sand.u32 %s94, 1
          %s383 = scalar_lea.sflag [#allocation3], %s382
          %s384 = sand.u32 %s94, 1
          %s385 = smul.addr %s384, 8
          %s386 = scalar_lea.vmem [#allocation2], %s385
          %387 = dma.done %s383, 128
        $region44: #{tpu_custom_call.1} parent=39 // pred_fallthru
          _
      $region40: #{tpu_custom_call.1} parent=5 // pred_fallthru
        _
    $region6: #{tpu_custom_call.1} parent=1 // loop_footer
      %s16 = sadd.s32 1, %s12
    $region7: #{tpu_custom_call.1} parent=1 // loop_footer_branch
      %11 = sbr.rel target = $region3
    $region8: #{tpu_custom_call.1} parent=1 // loop_exit
      _
    %388 = vsyncpa [#allocation3], 1
    %s389 = scalar_lea.sflag [#allocation3], 1
    %390 = vsyncpa %s389, 1

</llo_original>
